<compile_context>
chip_gen: v6e
topology: v6e:2x2x1
jax: 0.10.0
libtpu: 0.0.40
codegen_flags: <defaults>
</compile_context>

<pallas_src>
import jax
import jax.numpy as jnp
from jax.experimental import pallas as pl
from jax.experimental.pallas import tpu as pltpu


def _round_up(x: int, m: int) -> int:
    return ((x + m - 1) // m) * m


# ----------------------------------------------------------------------------
# Kernel
# ----------------------------------------------------------------------------
def _actor_critic_kernel(x_ref,
                         w1_ref, b1_ref,
                         w2_ref, b2_ref,
                         wh_ref, bh_ref,
                         logit_ref, value_ref):
    """Fused MLP on one (TM, obs) row tile:
       encoder (Linear->ReLU->Linear->ReLU) + fused (policy|value) head,
       writing logit and value outputs directly."""
    x = x_ref[...]

    # encoder layer 1: Linear(obs, 32) + ReLU
    h1 = jnp.dot(x, w1_ref[...], preferred_element_type=jnp.float32) + b1_ref[...]
    h1 = jnp.maximum(h1, 0.0)

    # encoder layer 2: Linear(32, 64) + ReLU
    h2 = jnp.dot(h1, w2_ref[...], preferred_element_type=jnp.float32) + b2_ref[...]
    h2 = jnp.maximum(h2, 0.0)

    # fused policy + value head: Linear(64, N_OUT) where columns
    # [0:action) = policy logits, [action] = value, rest = zero padding.
    out = jnp.dot(h2, wh_ref[...], preferred_element_type=jnp.float32) + bh_ref[...]

    a = logit_ref.shape[-1]
    logit_ref[...] = out[:, :a].astype(logit_ref.dtype)
    value_ref[...] = out[:, a:a + 1].astype(value_ref.dtype)


# ----------------------------------------------------------------------------
# One-time parameter preparation (hoisted out of the per-call path)
# ----------------------------------------------------------------------------
def prepare_kernel_params(params):
    """Transpose weights to [in, out] and fuse the policy/value heads into a
    single zero-padded (64, N_OUT) matmul.  Call once, reuse every forward."""
    w1_t = params["w1"].T.astype(jnp.float32)       # (obs, 32)
    w2_t = params["w2"].T.astype(jnp.float32)       # (32, 64)
    wp_t = params["wp"].T.astype(jnp.float32)       # (64, action)
    wv_t = params["wv"].T.astype(jnp.float32)       # (64, 1)
    b1 = params["b1"].reshape(1, -1).astype(jnp.float32)
    b2 = params["b2"].reshape(1, -1).astype(jnp.float32)

    hidden = w2_t.shape[1]
    action_shape = wp_t.shape[1]
    # Pad fused head width to a lane multiple; handles action_shape >= 128 too.
    n_out = _round_up(action_shape + 1, 128)

    wh = jnp.zeros((hidden, n_out), jnp.float32)
    wh = wh.at[:, :action_shape].set(wp_t)
    wh = wh.at[:, action_shape:action_shape + 1].set(wv_t)
    bh = jnp.zeros((1, n_out), jnp.float32)
    bh = bh.at[:, :action_shape].set(params["bp"].reshape(1, -1))
    bh = bh.at[:, action_shape:action_shape + 1].set(params["bv"].reshape(1, -1))

    return {
        "w1_t": w1_t, "b1": b1,
        "w2_t": w2_t, "b2": b2,
        "wh": wh, "bh": bh,
        "action_shape": action_shape,
        "n_out": n_out,
    }


def _choose_tile(M: int, tile_m: int, min_grid: int = 2) -> int:
    """Row-tile size: multiple of 8, capped at tile_m, and small enough that
    the grid has >= min_grid steps when M allows it (megacore on v7x)."""
    M8 = _round_up(M, 8)
    tm = min(tile_m, _round_up(pl.cdiv(M8, min_grid), 8))
    return max(tm, 8)


# ----------------------------------------------------------------------------
# Forward wrapper
# ----------------------------------------------------------------------------
def shared_actor_critic_forward(local_obs, kparams, *, tile_m: int = 8192):
    """local_obs: (batch, agent_num, obs_shape) float32.
    kparams: output of prepare_kernel_params.

    Returns dict with 'logit' (batch, agent_num, action_shape) and
    'value' (batch, agent_num, 1), matching the PyTorch module semantics.
    """
    batch, agent_num, obs_shape = local_obs.shape
    M = batch * agent_num
    x2d = local_obs.reshape(M, obs_shape).astype(jnp.float32)

    action_shape = kparams["action_shape"]
    n_out = kparams["n_out"]
    hidden = kparams["w2_t"].shape[1]

    # --- tile sizing -------------------------------------------------------
    TM = _choose_tile(M, tile_m)
    M_pad = _round_up(M, TM)
    if M_pad != M:
        x2d = jnp.pad(x2d, ((0, M_pad - M), (0, 0)))
    grid = (M_pad // TM,)

    # Weights / biases: full-array blocks with constant index_map -> DMA'd
    # once, resident in VMEM across all grid steps.
    def _const_spec(arr):
        return pl.BlockSpec(arr.shape, lambda i: (0, 0))

    flops = 2 * M_pad * (obs_shape * 32 + 32 * hidden + hidden * n_out)
    bytes_accessed = 4 * (
        M_pad * (obs_shape + action_shape + 1)
        + kparams["w1_t"].size + kparams["w2_t"].size + kparams["wh"].size
        + kparams["b1"].size + kparams["b2"].size + kparams["bh"].size
    )

    logit2d, value2d = pl.pallas_call(
        _actor_critic_kernel,
        out_shape=(
            jax.ShapeDtypeStruct((M_pad, action_shape), jnp.float32),
            jax.ShapeDtypeStruct((M_pad, 1), jnp.float32),
        ),
        grid_spec=pltpu.PrefetchScalarGridSpec(
            num_scalar_prefetch=0,
            grid=grid,
            in_specs=[
                pl.BlockSpec((TM, obs_shape), lambda i: (i, 0)),   # x row tile
                _const_spec(kparams["w1_t"]), _const_spec(kparams["b1"]),
                _const_spec(kparams["w2_t"]), _const_spec(kparams["b2"]),
                _const_spec(kparams["wh"]), _const_spec(kparams["bh"]),
            ],
            out_specs=(
                pl.BlockSpec((TM, action_shape), lambda i: (i, 0)),
                pl.BlockSpec((TM, 1), lambda i: (i, 0)),
            ),
        ),
        compiler_params=pltpu.CompilerParams(
            dimension_semantics=("parallel",),
        ),
        cost_estimate=pl.CostEstimate(
            flops=flops, transcendentals=0, bytes_accessed=bytes_accessed),
    )(x2d, kparams["w1_t"], kparams["b1"],
      kparams["w2_t"], kparams["b2"],
      kparams["wh"], kparams["bh"])

    # Drop padded rows (no-op slice when M_pad == M).
    if M_pad != M:
        logit2d = logit2d[:M]
        value2d = value2d[:M]

    return {
        "logit": logit2d.reshape(batch, agent_num, action_shape),
        "value": value2d.reshape(batch, agent_num, 1),
    }


# ----------------------------------------------------------------------------
# Parameter init / pure-JAX reference
# ----------------------------------------------------------------------------
def init_params(key, obs_shape, action_shape):
    """Deterministic synthetic parameters with the PyTorch nn.Linear shapes
    (weight: [out, in], bias: [out])."""
    ks = jax.random.split(key, 8)

    def lin(kw, kb, out_dim, in_dim):
        bound = 1.0 / jnp.sqrt(in_dim)
        w = jax.random.uniform(kw, (out_dim, in_dim), jnp.float32, -bound, bound)
        b = jax.random.uniform(kb, (out_dim,), jnp.float32, -bound, bound)
        return w, b

    w1, b1 = lin(ks[0], ks[1], 32, obs_shape)
    w2, b2 = lin(ks[2], ks[3], 64, 32)
    wp, bp = lin(ks[4], ks[5], action_shape, 64)
    wv, bv = lin(ks[6], ks[7], 1, 64)
    return {"w1": w1, "b1": b1, "w2": w2, "b2": b2,
            "wp": wp, "bp": bp, "wv": wv, "bv": bv}


def reference_forward(local_obs, params):
    """Pure-JAX reference implementing the PyTorch forward exactly."""
    h1 = jax.nn.relu(local_obs @ params["w1"].T + params["b1"])
    h2 = jax.nn.relu(h1 @ params["w2"].T + params["b2"])
    logit = h2 @ params["wp"].T + params["bp"]
    value = h2 @ params["wv"].T + params["bv"]
    return {"logit": logit, "value": value}


if __name__ == "__main__":
    key = jax.random.PRNGKey(0)
    k_param, k_obs = jax.random.split(key)

    batch = 2
    agent_num = 4
    obs_shape = 16
    action_shape = 6

    params = init_params(k_param, obs_shape, action_shape)
    kparams = prepare_kernel_params(params)   # one-time weight prep (hoisted)
    local_obs = jax.random.normal(k_obs, (batch, agent_num, obs_shape), jnp.float32)

    out = shared_actor_critic_forward(local_obs, kparams)
    jax.block_until_ready(out)

    ref = reference_forward(local_obs, params)
    assert out["logit"].shape == (batch, agent_num, action_shape)
    assert out["value"].shape == (batch, agent_num, 1)
    assert jnp.allclose(out["logit"], ref["logit"], atol=1e-5, rtol=1e-5)
    assert jnp.allclose(out["value"], ref["value"], atol=1e-5, rtol=1e-5)

    # Also exercise a larger, non-multiple M to hit the tiled + padded path
    # (grid with >= 2 steps, row padding, narrow masked output stores).
    big_obs = jax.random.normal(jax.random.PRNGKey(1), (37, 5, obs_shape), jnp.float32)
    out_big = shared_actor_critic_forward(big_obs, kparams, tile_m=128)
    jax.block_until_ready(out_big)
    ref_big = reference_forward(big_obs, params)
    assert jnp.allclose(out_big["logit"], ref_big["logit"], atol=1e-5, rtol=1e-5)
    assert jnp.allclose(out_big["value"], ref_big["value"], atol=1e-5, rtol=1e-5)

    print("KERNEL_OK")
</pallas_src>

<mosaic_0001>
module attributes {stable_mosaic.version = 11 : i64} {
  func.func @_actor_critic_kernel(%arg0: i32, %arg1: memref<8x16xf32, #tpu.memory_space<vmem>>, %arg2: memref<16x32xf32, #tpu.memory_space<vmem>>, %arg3: memref<1x32xf32, #tpu.memory_space<vmem>>, %arg4: memref<32x64xf32, #tpu.memory_space<vmem>>, %arg5: memref<1x64xf32, #tpu.memory_space<vmem>>, %arg6: memref<64x128xf32, #tpu.memory_space<vmem>>, %arg7: memref<1x128xf32, #tpu.memory_space<vmem>>, %arg8: memref<8x6xf32, #tpu.memory_space<vmem>>, %arg9: memref<8x1xf32, #tpu.memory_space<vmem>>) attributes {dimension_semantics = [#tpu.dimension_semantics<parallel>], iteration_bounds = array<i64: 1>, scalar_prefetch = 0 : i64, scratch_operands = 0 : i64, tpu.core_type = #tpu.core_type<tc>, window_params = [{transform_indices = @transform_0, window_bounds = array<i64: 8, 16>}, {pipeline_mode = #tpu.pipeline_mode<synchronous>, transform_indices = @transform_1, window_bounds = array<i64: 16, 32>}, {pipeline_mode = #tpu.pipeline_mode<synchronous>, transform_indices = @transform_2, window_bounds = array<i64: 1, 32>}, {pipeline_mode = #tpu.pipeline_mode<synchronous>, transform_indices = @transform_3, window_bounds = array<i64: 32, 64>}, {pipeline_mode = #tpu.pipeline_mode<synchronous>, transform_indices = @transform_4, window_bounds = array<i64: 1, 64>}, {pipeline_mode = #tpu.pipeline_mode<synchronous>, transform_indices = @transform_5, window_bounds = array<i64: 64, 128>}, {pipeline_mode = #tpu.pipeline_mode<synchronous>, transform_indices = @transform_6, window_bounds = array<i64: 1, 128>}, {transform_indices = @transform_7, window_bounds = array<i64: 8, 6>}, {transform_indices = @transform_8, window_bounds = array<i64: 8, 1>}]} {
    %c0 = arith.constant 0 : index
    %c0_0 = arith.constant 0 : index
    %0 = vector.load %arg1[%c0, %c0_0] : memref<8x16xf32, #tpu.memory_space<vmem>>, vector<8x16xf32>
    %c0_1 = arith.constant 0 : index
    %c0_2 = arith.constant 0 : index
    %1 = vector.load %arg2[%c0_1, %c0_2] : memref<16x32xf32, #tpu.memory_space<vmem>>, vector<16x32xf32>
    %cst = arith.constant dense<0.000000e+00> : vector<8x32xf32>
    %2 = tpu.matmul %0, %1, %cst {dimension_numbers = #tpu.dot_dimension_numbers<[1], [0], [0], [1], [0, 0, 1, 1], [], []>} : vector<8x16xf32>, vector<16x32xf32>, vector<8x32xf32> -> vector<8x32xf32>
    %c0_3 = arith.constant 0 : index
    %c0_4 = arith.constant 0 : index
    %3 = vector.load %arg3[%c0_3, %c0_4] : memref<1x32xf32, #tpu.memory_space<vmem>>, vector<1x32xf32>
    %4 = vector.broadcast %3 : vector<1x32xf32> to vector<8x32xf32>
    %5 = arith.addf %2, %4 : vector<8x32xf32>
    %cst_5 = arith.constant 0.000000e+00 : f32
    %6 = vector.broadcast %cst_5 : f32 to vector<8x32xf32>
    %7 = arith.maximumf %5, %6 : vector<8x32xf32>
    %c0_6 = arith.constant 0 : index
    %c0_7 = arith.constant 0 : index
    %8 = vector.load %arg4[%c0_6, %c0_7] : memref<32x64xf32, #tpu.memory_space<vmem>>, vector<32x64xf32>
    %cst_8 = arith.constant dense<0.000000e+00> : vector<8x64xf32>
    %9 = tpu.matmul %7, %8, %cst_8 {dimension_numbers = #tpu.dot_dimension_numbers<[1], [0], [0], [1], [0, 0, 1, 1], [], []>} : vector<8x32xf32>, vector<32x64xf32>, vector<8x64xf32> -> vector<8x64xf32>
    %c0_9 = arith.constant 0 : index
    %c0_10 = arith.constant 0 : index
    %10 = vector.load %arg5[%c0_9, %c0_10] : memref<1x64xf32, #tpu.memory_space<vmem>>, vector<1x64xf32>
    %11 = vector.broadcast %10 : vector<1x64xf32> to vector<8x64xf32>
    %12 = arith.addf %9, %11 : vector<8x64xf32>
    %cst_11 = arith.constant 0.000000e+00 : f32
    %13 = vector.broadcast %cst_11 : f32 to vector<8x64xf32>
    %14 = arith.maximumf %12, %13 : vector<8x64xf32>
    %c0_12 = arith.constant 0 : index
    %c0_13 = arith.constant 0 : index
    %15 = vector.load %arg6[%c0_12, %c0_13] : memref<64x128xf32, #tpu.memory_space<vmem>>, vector<64x128xf32>
    %cst_14 = arith.constant dense<0.000000e+00> : vector<8x128xf32>
    %16 = tpu.matmul %14, %15, %cst_14 {dimension_numbers = #tpu.dot_dimension_numbers<[1], [0], [0], [1], [0, 0, 1, 1], [], []>} : vector<8x64xf32>, vector<64x128xf32>, vector<8x128xf32> -> vector<8x128xf32>
    %c0_15 = arith.constant 0 : index
    %c0_16 = arith.constant 0 : index
    %17 = vector.load %arg7[%c0_15, %c0_16] : memref<1x128xf32, #tpu.memory_space<vmem>>, vector<1x128xf32>
    %18 = vector.broadcast %17 : vector<1x128xf32> to vector<8x128xf32>
    %19 = arith.addf %16, %18 : vector<8x128xf32>
    %20 = vector.extract_strided_slice %19 {offsets = [0, 0], sizes = [8, 6], strides = [1, 1]} : vector<8x128xf32> to vector<8x6xf32>
    %c0_17 = arith.constant 0 : index
    %c0_18 = arith.constant 0 : index
    %21 = vector.load %arg8[%c0_17, %c0_18] : memref<8x6xf32, #tpu.memory_space<vmem>>, vector<8x6xf32>
    tpu.vector_store %arg8[%c0_17, %c0_18], %20 {strides = array<i32>} : memref<8x6xf32, #tpu.memory_space<vmem>>, vector<8x6xf32>,
    %22 = vector.extract_strided_slice %19 {offsets = [0, 6], sizes = [8, 1], strides = [1, 1]} : vector<8x128xf32> to vector<8x1xf32>
    %c0_19 = arith.constant 0 : index
    %c0_20 = arith.constant 0 : index
    %23 = vector.load %arg9[%c0_19, %c0_20] : memref<8x1xf32, #tpu.memory_space<vmem>>, vector<8x1xf32>
    tpu.vector_store %arg9[%c0_19, %c0_20], %22 {strides = array<i32>} : memref<8x1xf32, #tpu.memory_space<vmem>>, vector<8x1xf32>,
    return
  }
  func.func @transform_0(%arg0: i32) -> (i32, i32) {
    %c0_i32 = arith.constant 0 : i32
    %c0_i32_0 = arith.constant 0 : i32
    return %arg0, %c0_i32 : i32, i32
  }
  func.func @transform_1(%arg0: i32) -> (i32, i32) {
    %c0_i32 = arith.constant 0 : i32
    %c0_i32_0 = arith.constant 0 : i32
    %c0_i32_1 = arith.constant 0 : i32
    return %c0_i32, %c0_i32_0 : i32, i32
  }
  func.func @transform_2(%arg0: i32) -> (i32, i32) {
    %c0_i32 = arith.constant 0 : i32
    %c0_i32_0 = arith.constant 0 : i32
    %c0_i32_1 = arith.constant 0 : i32
    return %c0_i32, %c0_i32_0 : i32, i32
  }
  func.func @transform_3(%arg0: i32) -> (i32, i32) {
    %c0_i32 = arith.constant 0 : i32
    %c0_i32_0 = arith.constant 0 : i32
    %c0_i32_1 = arith.constant 0 : i32
    return %c0_i32, %c0_i32_0 : i32, i32
  }
  func.func @transform_4(%arg0: i32) -> (i32, i32) {
    %c0_i32 = arith.constant 0 : i32
    %c0_i32_0 = arith.constant 0 : i32
    %c0_i32_1 = arith.constant 0 : i32
    return %c0_i32, %c0_i32_0 : i32, i32
  }
  func.func @transform_5(%arg0: i32) -> (i32, i32) {
    %c0_i32 = arith.constant 0 : i32
    %c0_i32_0 = arith.constant 0 : i32
    %c0_i32_1 = arith.constant 0 : i32
    return %c0_i32, %c0_i32_0 : i32, i32
  }
  func.func @transform_6(%arg0: i32) -> (i32, i32) {
    %c0_i32 = arith.constant 0 : i32
    %c0_i32_0 = arith.constant 0 : i32
    %c0_i32_1 = arith.constant 0 : i32
    return %c0_i32, %c0_i32_0 : i32, i32
  }
  func.func @transform_7(%arg0: i32) -> (i32, i32) {
    %c0_i32 = arith.constant 0 : i32
    %c0_i32_0 = arith.constant 0 : i32
    return %arg0, %c0_i32 : i32, i32
  }
  func.func @transform_8(%arg0: i32) -> (i32, i32) {
    %c0_i32 = arith.constant 0 : i32
    %c0_i32_0 = arith.constant 0 : i32
    return %arg0, %c0_i32 : i32, i32
  }
}

</mosaic_0001>

<llo_original>
// kernel: tpu_custom_call.1
$region0: #{tpu_custom_call.1}
  #allocation0 [shape = 'u32[]', space=smem, size = 0x4, offset = 0x4, fixed_abs, tag = 'smem constant byte address 0x4 - core index']
  #allocation1 [shape = 'u32[144,128]{1,0:T(1,128)}', space=vmem, size = 0x12000, scoped, tag = 'internal scratch']
  %s0 = inlined_call_operand.hbm [shape: f32[8,16], index: 0, kind: input, shape index: {}]
  %s1 = inlined_call_operand.hbm [shape: f32[16,32], index: 1, kind: input, shape index: {}]
  %s2 = inlined_call_operand.vmem [shape: f32[1,32], index: 2, kind: input, shape index: {}]
  %s3 = inlined_call_operand.hbm [shape: f32[32,64], index: 3, kind: input, shape index: {}]
  %s4 = inlined_call_operand.vmem [shape: f32[1,64], index: 4, kind: input, shape index: {}]
  %s5 = inlined_call_operand.hbm [shape: f32[64,128], index: 5, kind: input, shape index: {}]
  %s6 = inlined_call_operand.vmem [shape: f32[1,128], index: 6, kind: input, shape index: {}]
  %s7 = inlined_call_operand.hbm [shape: f32[8,6], index: 7, kind: output, shape index: {0}]
  %s8 = inlined_call_operand.vmem [shape: f32[8,1], index: 8, kind: output, shape index: {1}]
  %9 = xla_tuple %s7, %s8
  %s10 = sld [smem:[#allocation0]]
  $region62: #{tpu_custom_call.1} parent=0
    _
  %s12 = ssub.s32 1, %s10
  %s13 = scalar_select 0, %s12, %s10
  $region1: #{tpu_custom_call.1} parent=0
    #allocation2 [shape = 'u8[4096]{0}', space=vmem, size = 0x1000, scoped, tag = 'input window, operand 0, single buffered']
    #allocation3 [shape = 's32[1]{0}', space=sflag, size = 0x4, scoped, tag = 'scoped memory for tpu_custom_call.1']
    #allocation4 [shape = 's32[1]{0}', space=sflag, size = 0x4, scoped, tag = 'scoped memory for tpu_custom_call.1']
    #allocation5 [shape = 'u8[8192]{0}', space=vmem, size = 0x2000, scoped, tag = 'input window, operand 1, single buffered']
    #allocation6 [shape = 's32[1]{0}', space=sflag, size = 0x4, scoped, tag = 'scoped memory for tpu_custom_call.1']
    #allocation7 [shape = 'u8[16384]{0}', space=vmem, size = 0x4000, scoped, tag = 'input window, operand 3, single buffered']
    #allocation8 [shape = 'u8[32768]{0}', space=vmem, size = 0x8000, scoped, tag = 'input window, operand 5, single buffered']
    #allocation9 [shape = 's32[1]{0}', space=sflag, size = 0x4, scoped, tag = 'scoped memory for tpu_custom_call.1']
    #allocation10 [shape = 'u8[4096]{0}', space=vmem, size = 0x1000, scoped, tag = 'output window, operand 0, single buffered']
    %14 = vsyncpa [#allocation3], 0
    %15 = vsyncpa [#allocation6], 0
    %16 = vsyncpa [#allocation9], 0
    %17 = vsyncpa [#allocation4], 0
    // Predicated region
    $region2: #{tpu_custom_call.1} parent=1 // pred_check
      _
    $region3: #{tpu_custom_call.1} parent=1 // pred_check_branch
      %19 = sbr.rel (0) target = $region5
    $region4: #{tpu_custom_call.1} parent=1 // pred_region
      %s21 = ssub.s32 128, 128
      %22 = vsyncadd [#allocation3], %s21
      %s24 = sshll.u32 [#allocation2], 4
      %s25 = int_to_ptr.vmem [resolvable:$true] %s24
      %27 = dma.hbm_to_vmem [thread:$0]  %s0, 128, %s25, [#allocation3]
    $region5: #{tpu_custom_call.1} parent=1 // pred_fallthru
      _
    // Predicated region
    $region6: #{tpu_custom_call.1} parent=1 // pred_check
      _
    $region7: #{tpu_custom_call.1} parent=1 // pred_check_branch
      %29 = sbr.rel (0) target = $region9
    $region8: #{tpu_custom_call.1} parent=1 // pred_region
      %s31 = ssub.s32 256, 256
      %32 = vsyncadd [#allocation6], %s31
      %s33 = sshll.u32 [#allocation5], 4
      %s34 = int_to_ptr.vmem [resolvable:$true] %s33
      %39 = dma.hbm_to_vmem [thread:$0]  %s1, 256, %s34, [#allocation6], 128, 128, 8
    $region9: #{tpu_custom_call.1} parent=1 // pred_fallthru
      _
    // Predicated region
    $region10: #{tpu_custom_call.1} parent=1 // pred_check
      _
    $region11: #{tpu_custom_call.1} parent=1 // pred_check_branch
      %41 = sbr.rel (0) target = $region13
    $region12: #{tpu_custom_call.1} parent=1 // pred_region
      _
    $region13: #{tpu_custom_call.1} parent=1 // pred_fallthru
      _
    // Predicated region
    $region14: #{tpu_custom_call.1} parent=1 // pred_check
      _
    $region15: #{tpu_custom_call.1} parent=1 // pred_check_branch
      %43 = sbr.rel (0) target = $region17
    $region16: #{tpu_custom_call.1} parent=1 // pred_region
      %s45 = ssub.s32 512, 512
      %46 = vsyncadd [#allocation6], %s45
      %s47 = sshll.u32 [#allocation7], 4
      %s48 = int_to_ptr.vmem [resolvable:$true] %s47
      %53 = dma.hbm_to_vmem [thread:$0]  %s3, 512, %s48, [#allocation6], 128, 128, 8
    $region17: #{tpu_custom_call.1} parent=1 // pred_fallthru
      _
    // Predicated region
    $region18: #{tpu_custom_call.1} parent=1 // pred_check
      _
    $region19: #{tpu_custom_call.1} parent=1 // pred_check_branch
      %55 = sbr.rel (0) target = $region21
    $region20: #{tpu_custom_call.1} parent=1 // pred_region
      _
    $region21: #{tpu_custom_call.1} parent=1 // pred_fallthru
      _
    // Predicated region
    $region22: #{tpu_custom_call.1} parent=1 // pred_check
      _
    $region23: #{tpu_custom_call.1} parent=1 // pred_check_branch
      %57 = sbr.rel (0) target = $region25
    $region24: #{tpu_custom_call.1} parent=1 // pred_region
      %s59 = ssub.s32 1024, 1024
      %60 = vsyncadd [#allocation9], %s59
      %s61 = sshll.u32 [#allocation8], 4
      %s62 = int_to_ptr.vmem [resolvable:$true] %s61
      %67 = dma.hbm_to_vmem [thread:$0]  %s5, 1024, %s62, [#allocation9], 128, 128, 8
    $region25: #{tpu_custom_call.1} parent=1 // pred_fallthru
      _
    // Predicated region
    $region26: #{tpu_custom_call.1} parent=1 // pred_check
      _
    $region27: #{tpu_custom_call.1} parent=1 // pred_check_branch
      %69 = sbr.rel (0) target = $region29
    $region28: #{tpu_custom_call.1} parent=1 // pred_region
      _
    $region29: #{tpu_custom_call.1} parent=1 // pred_fallthru
      _
    // Predicated region
    $region30: #{tpu_custom_call.1} parent=1 // pred_check
      _
    $region31: #{tpu_custom_call.1} parent=1 // pred_check_branch
      %71 = sbr.rel (0) target = $region33
    $region32: #{tpu_custom_call.1} parent=1 // pred_region
      %72 = dma.done [#allocation3], 128
    $region33: #{tpu_custom_call.1} parent=1 // pred_fallthru
      _
    // Predicated region
    $region34: #{tpu_custom_call.1} parent=1 // pred_check
      _
    $region35: #{tpu_custom_call.1} parent=1 // pred_check_branch
      %74 = sbr.rel (0) target = $region37
    $region36: #{tpu_custom_call.1} parent=1 // pred_region
      %75 = dma.done [#allocation6], 256
    $region37: #{tpu_custom_call.1} parent=1 // pred_fallthru
      _
    // Predicated region
    $region38: #{tpu_custom_call.1} parent=1 // pred_check
      _
    $region39: #{tpu_custom_call.1} parent=1 // pred_check_branch
      %77 = sbr.rel (0) target = $region41
    $region40: #{tpu_custom_call.1} parent=1 // pred_region
      %78 = dma.done [#allocation6], 512
    $region41: #{tpu_custom_call.1} parent=1 // pred_fallthru
      _
    // Predicated region
    $region42: #{tpu_custom_call.1} parent=1 // pred_check
      _
    $region43: #{tpu_custom_call.1} parent=1 // pred_check_branch
      %80 = sbr.rel (0) target = $region45
    $region44: #{tpu_custom_call.1} parent=1 // pred_region
      %81 = dma.done [#allocation9], 1024
    $region45: #{tpu_custom_call.1} parent=1 // pred_fallthru
      _
    %v82 = vld [vmem:[#allocation2] sm:$0xff]
    %v83 = vld [vmem:[#allocation5] sm:$0xff]
    %v84 = vld [vmem:[#allocation5 + $0x8] sm:$0xff]
    %v85 = vld [vmem:[%s2] sm:$0x1]
    %v87 = vlaneseq
    %v88 = vshrl.u32 %v87, 7
    %v89 = vsub.s32 0, %v88
    %v90 = vrot.slane %v85, %v89
    %vm92 = vcmask 130048
    %v94 = vsel %vm92, %v82, 0
    %96 = vmatprep.subr.mxu0 0.0
    %97 = vmatpush1.msra.mxu0 0.0
    %98 = vmatprep.subr.mxu0 0.0
    %99 = vmatpush1.msra.mxu0 0.0
    %100 = vmatprep.subr.mxu0 0.0
    %101 = vmatpush1.msra.mxu0 0.0
    %102 = vmatprep.subr.mxu0 0.0
    %103 = vmatpush1.msra.mxu0 0.0
    %104 = vmatprep.subr.mxu0 0.0
    %105 = vmatpush1.msra.mxu0 0.0
    %106 = vmatprep.subr.mxu0 0.0
    %107 = vmatpush1.msra.mxu0 0.0
    %108 = vmatprep.subr.mxu0 0.0
    %109 = vmatpush1.msra.mxu0 0.0
    %110 = vmatprep.subr.mxu0 0.0
    %111 = vmatpush1.msra.mxu0 0.0
    %112 = vmatprep.subr.mxu0 0.0
    %113 = vmatpush1.msra.mxu0 0.0
    %114 = vmatprep.subr.mxu0 0.0
    %115 = vmatpush1.msra.mxu0 0.0
    %116 = vmatprep.subr.mxu0 0.0
    %117 = vmatpush1.msra.mxu0 0.0
    %118 = vmatprep.subr.mxu0 0.0
    %119 = vmatpush1.msra.mxu0 0.0
    %120 = vmatprep.subr.mxu0 0.0
    %121 = vmatpush1.msra.mxu0 0.0
    %122 = vmatprep.subr.mxu0 0.0
    %123 = vmatpush1.msra.mxu0 0.0
    %124 = vmatprep.subr.mxu0 0.0
    %125 = vmatpush1.msra.mxu0 %v84
    %126 = vmatprep.subr.mxu0 0.0
    %127 = vmatpush1.msra.mxu0 %v83
    %128 = vmatprep.subr.mxu0 0.0
    %129 = vmatpush2.msra.mxu0 0.0
    %130 = vmatprep.subr.mxu0 0.0
    %131 = vmatpush2.msra.mxu0 0.0
    %132 = vmatprep.subr.mxu0 0.0
    %133 = vmatpush2.msra.mxu0 0.0
    %134 = vmatprep.subr.mxu0 0.0
    %135 = vmatpush2.msra.mxu0 0.0
    %136 = vmatprep.subr.mxu0 0.0
    %137 = vmatpush2.msra.mxu0 0.0
    %138 = vmatprep.subr.mxu0 0.0
    %139 = vmatpush2.msra.mxu0 0.0
    %140 = vmatprep.subr.mxu0 0.0
    %141 = vmatpush2.msra.mxu0 0.0
    %142 = vmatprep.subr.mxu0 0.0
    %143 = vmatpush2.msra.mxu0 0.0
    %144 = vmatprep.subr.mxu0 0.0
    %145 = vmatpush2.msra.mxu0 0.0
    %146 = vmatprep.subr.mxu0 0.0
    %147 = vmatpush2.msra.mxu0 0.0
    %148 = vmatprep.subr.mxu0 0.0
    %149 = vmatpush2.msra.mxu0 0.0
    %150 = vmatprep.subr.mxu0 0.0
    %151 = vmatpush2.msra.mxu0 0.0
    %152 = vmatprep.subr.mxu0 0.0
    %153 = vmatpush2.msra.mxu0 0.0
    %154 = vmatprep.subr.mxu0 0.0
    %155 = vmatpush2.msra.mxu0 0.0
    %156 = vmatprep.subr.mxu0 0.0
    %157 = vmatpush2.msra.mxu0 0.0
    %158 = vmatprep.subr.mxu0 0.0
    %159 = vmatpush2.msra.mxu0 0.0
    %160 = vmatprep.mubr.f32.mxu0 0.0
    %161 = vmatmul.mubr.f32.gmra.mxu0 %v94
    %v162 = vpop.f32.mrf.mxu0
    %v163 = vadd.f32 %v90, %v162
    %v164 = vpop.f32.mrf.mxu0
    %165 = vdwg.mxu0
    %v166 = vmax.f32 %v163, 0.0
    %v167 = vld [vmem:[#allocation7] sm:$0xff]
    %v168 = vld [vmem:[#allocation7 + $0x8] sm:$0xff]
    %v169 = vld [vmem:[#allocation7 + $0x10] sm:$0xff]
    %v170 = vld [vmem:[#allocation7 + $0x18] sm:$0xff]
    %v171 = vld [vmem:[%s4] sm:$0x1]
    %v173 = vlaneseq
    %v174 = vshrl.u32 %v173, 7
    %v175 = vsub.s32 0, %v174
    %v176 = vrot.slane %v171, %v175
    %vm178 = vcmask 261120
    %v180 = vsel %vm178, %v166, 0
    %182 = vmatprep.subr.mxu0 0.0
    %183 = vmatpush1.msra.mxu0 0.0
    %184 = vmatprep.subr.mxu0 0.0
    %185 = vmatpush1.msra.mxu0 0.0
    %186 = vmatprep.subr.mxu0 0.0
    %187 = vmatpush1.msra.mxu0 0.0
    %188 = vmatprep.subr.mxu0 0.0
    %189 = vmatpush1.msra.mxu0 0.0
    %190 = vmatprep.subr.mxu0 0.0
    %191 = vmatpush1.msra.mxu0 0.0
    %192 = vmatprep.subr.mxu0 0.0
    %193 = vmatpush1.msra.mxu0 0.0
    %194 = vmatprep.subr.mxu0 0.0
    %195 = vmatpush1.msra.mxu0 0.0
    %196 = vmatprep.subr.mxu0 0.0
    %197 = vmatpush1.msra.mxu0 0.0
    %198 = vmatprep.subr.mxu0 0.0
    %199 = vmatpush1.msra.mxu0 0.0
    %200 = vmatprep.subr.mxu0 0.0
    %201 = vmatpush1.msra.mxu0 0.0
    %202 = vmatprep.subr.mxu0 0.0
    %203 = vmatpush1.msra.mxu0 0.0
    %204 = vmatprep.subr.mxu0 0.0
    %205 = vmatpush1.msra.mxu0 0.0
    %206 = vmatprep.subr.mxu0 0.0
    %207 = vmatpush1.msra.mxu0 %v170
    %208 = vmatprep.subr.mxu0 0.0
    %209 = vmatpush1.msra.mxu0 %v169
    %210 = vmatprep.subr.mxu0 0.0
    %211 = vmatpush1.msra.mxu0 %v168
    %212 = vmatprep.subr.mxu0 0.0
    %213 = vmatpush1.msra.mxu0 %v167
    %214 = vmatprep.subr.mxu0 0.0
    %215 = vmatpush2.msra.mxu0 0.0
    %216 = vmatprep.subr.mxu0 0.0
    %217 = vmatpush2.msra.mxu0 0.0
    %218 = vmatprep.subr.mxu0 0.0
    %219 = vmatpush2.msra.mxu0 0.0
    %220 = vmatprep.subr.mxu0 0.0
    %221 = vmatpush2.msra.mxu0 0.0
    %222 = vmatprep.subr.mxu0 0.0
    %223 = vmatpush2.msra.mxu0 0.0
    %224 = vmatprep.subr.mxu0 0.0
    %225 = vmatpush2.msra.mxu0 0.0
    %226 = vmatprep.subr.mxu0 0.0
    %227 = vmatpush2.msra.mxu0 0.0
    %228 = vmatprep.subr.mxu0 0.0
    %229 = vmatpush2.msra.mxu0 0.0
    %230 = vmatprep.subr.mxu0 0.0
    %231 = vmatpush2.msra.mxu0 0.0
    %232 = vmatprep.subr.mxu0 0.0
    %233 = vmatpush2.msra.mxu0 0.0
    %234 = vmatprep.subr.mxu0 0.0
    %235 = vmatpush2.msra.mxu0 0.0
    %236 = vmatprep.subr.mxu0 0.0
    %237 = vmatpush2.msra.mxu0 0.0
    %238 = vmatprep.subr.mxu0 0.0
    %239 = vmatpush2.msra.mxu0 0.0
    %240 = vmatprep.subr.mxu0 0.0
    %241 = vmatpush2.msra.mxu0 0.0
    %242 = vmatprep.subr.mxu0 0.0
    %243 = vmatpush2.msra.mxu0 0.0
    %244 = vmatprep.subr.mxu0 0.0
    %245 = vmatpush2.msra.mxu0 0.0
    %246 = vmatprep.mubr.f32.mxu0 0.0
    %247 = vmatmul.mubr.f32.gmra.mxu0 %v180
    %v248 = vpop.f32.mrf.mxu0
    %v249 = vadd.f32 %v176, %v248
    %v250 = vpop.f32.mrf.mxu0
    %251 = vdwg.mxu0
    %v252 = vmax.f32 %v249, 0.0
    %v253 = vld [vmem:[#allocation8] sm:$0xff]
    %v254 = vld [vmem:[#allocation8 + $0x8] sm:$0xff]
    %v255 = vld [vmem:[#allocation8 + $0x10] sm:$0xff]
    %v256 = vld [vmem:[#allocation8 + $0x18] sm:$0xff]
    %v257 = vld [vmem:[#allocation8 + $0x20] sm:$0xff]
    %v258 = vld [vmem:[#allocation8 + $0x28] sm:$0xff]
    %v259 = vld [vmem:[#allocation8 + $0x30] sm:$0xff]
    %v260 = vld [vmem:[#allocation8 + $0x38] sm:$0xff]
    %v261 = vld [vmem:[%s6] sm:$0x1]
    %v263 = vlaneseq
    %v264 = vshrl.u32 %v263, 7
    %v265 = vsub.s32 0, %v264
    %v266 = vrot.slane %v261, %v265
    %vm268 = vcmask 523264
    %v270 = vsel %vm268, %v252, 0
    %272 = vmatprep.subr.mxu0 0.0
    %273 = vmatpush1.msra.mxu0 0.0
    %274 = vmatprep.subr.mxu0 0.0
    %275 = vmatpush1.msra.mxu0 0.0
    %276 = vmatprep.subr.mxu0 0.0
    %277 = vmatpush1.msra.mxu0 0.0
    %278 = vmatprep.subr.mxu0 0.0
    %279 = vmatpush1.msra.mxu0 0.0
    %280 = vmatprep.subr.mxu0 0.0
    %281 = vmatpush1.msra.mxu0 0.0
    %282 = vmatprep.subr.mxu0 0.0
    %283 = vmatpush1.msra.mxu0 0.0
    %284 = vmatprep.subr.mxu0 0.0
    %285 = vmatpush1.msra.mxu0 0.0
    %286 = vmatprep.subr.mxu0 0.0
    %287 = vmatpush1.msra.mxu0 0.0
    %288 = vmatprep.subr.mxu0 0.0
    %289 = vmatpush1.msra.mxu0 %v260
    %290 = vmatprep.subr.mxu0 0.0
    %291 = vmatpush1.msra.mxu0 %v259
    %292 = vmatprep.subr.mxu0 0.0
    %293 = vmatpush1.msra.mxu0 %v258
    %294 = vmatprep.subr.mxu0 0.0
    %295 = vmatpush1.msra.mxu0 %v257
    %296 = vmatprep.subr.mxu0 0.0
    %297 = vmatpush1.msra.mxu0 %v256
    %298 = vmatprep.subr.mxu0 0.0
    %299 = vmatpush1.msra.mxu0 %v255
    %300 = vmatprep.subr.mxu0 0.0
    %301 = vmatpush1.msra.mxu0 %v254
    %302 = vmatprep.subr.mxu0 0.0
    %303 = vmatpush1.msra.mxu0 %v253
    %304 = vmatprep.subr.mxu0 0.0
    %305 = vmatpush2.msra.mxu0 0.0
    %306 = vmatprep.subr.mxu0 0.0
    %307 = vmatpush2.msra.mxu0 0.0
    %308 = vmatprep.subr.mxu0 0.0
    %309 = vmatpush2.msra.mxu0 0.0
    %310 = vmatprep.subr.mxu0 0.0
    %311 = vmatpush2.msra.mxu0 0.0
    %312 = vmatprep.subr.mxu0 0.0
    %313 = vmatpush2.msra.mxu0 0.0
    %314 = vmatprep.subr.mxu0 0.0
    %315 = vmatpush2.msra.mxu0 0.0
    %316 = vmatprep.subr.mxu0 0.0
    %317 = vmatpush2.msra.mxu0 0.0
    %318 = vmatprep.subr.mxu0 0.0
    %319 = vmatpush2.msra.mxu0 0.0
    %320 = vmatprep.subr.mxu0 0.0
    %321 = vmatpush2.msra.mxu0 0.0
    %322 = vmatprep.subr.mxu0 0.0
    %323 = vmatpush2.msra.mxu0 0.0
    %324 = vmatprep.subr.mxu0 0.0
    %325 = vmatpush2.msra.mxu0 0.0
    %326 = vmatprep.subr.mxu0 0.0
    %327 = vmatpush2.msra.mxu0 0.0
    %328 = vmatprep.subr.mxu0 0.0
    %329 = vmatpush2.msra.mxu0 0.0
    %330 = vmatprep.subr.mxu0 0.0
    %331 = vmatpush2.msra.mxu0 0.0
    %332 = vmatprep.subr.mxu0 0.0
    %333 = vmatpush2.msra.mxu0 0.0
    %334 = vmatprep.subr.mxu0 0.0
    %335 = vmatpush2.msra.mxu0 0.0
    %336 = vmatprep.mubr.f32.mxu0 0.0
    %337 = vmatmul.mubr.f32.gmra.mxu0 %v270
    %v338 = vpop.f32.mrf.mxu0
    %v339 = vadd.f32 %v266, %v338
    %v340 = vpop.f32.mrf.mxu0
    %341 = vdwg.mxu0
    %vm342 = vcmask 48128
    %343 = vst.msk [vmem:[#allocation10] sm:$0xff] %vm342, %v339
    %345 = vrot.lane.b32.xlu0 %v339, 122
    %v346 = vpop.permute.xlu0 %345
    %vm348 = vcmask 7168
    %349 = vst.msk [vmem:[%s8] sm:$0xff] %vm348, %v346
    // Predicated region
    $region46: #{tpu_custom_call.1} parent=1 // pred_check
      _
    $region47: #{tpu_custom_call.1} parent=1 // pred_check_branch
      %351 = sbr.rel (0) target = $region49
    $region48: #{tpu_custom_call.1} parent=1 // pred_region
      %s353 = ssub.s32 128, 128
      %354 = vsyncadd [#allocation4], %s353
      %s356 = sshll.u32 [#allocation10], 4
      %s357 = int_to_ptr.vmem [resolvable:$true] %s356
      %359 = dma.vmem_to_hbm [thread:$0]  %s357, 128, %s7, [#allocation4]
    $region49: #{tpu_custom_call.1} parent=1 // pred_fallthru
      _
    // Predicated region
    $region50: #{tpu_custom_call.1} parent=1 // pred_check
      _
    $region51: #{tpu_custom_call.1} parent=1 // pred_check_branch
      %361 = sbr.rel (0) target = $region53
    $region52: #{tpu_custom_call.1} parent=1 // pred_region
      _
    $region53: #{tpu_custom_call.1} parent=1 // pred_fallthru
      _
    // Predicated region
    $region54: #{tpu_custom_call.1} parent=1 // pred_check
      _
    $region55: #{tpu_custom_call.1} parent=1 // pred_check_branch
      %363 = sbr.rel (0) target = $region57
    $region56: #{tpu_custom_call.1} parent=1 // pred_region
      %364 = dma.done [#allocation4], 128
    $region57: #{tpu_custom_call.1} parent=1 // pred_fallthru
      _
    // Predicated region
    $region58: #{tpu_custom_call.1} parent=1 // pred_check
      _
    $region59: #{tpu_custom_call.1} parent=1 // pred_check_branch
      %366 = sbr.rel (0) target = $region61
    $region60: #{tpu_custom_call.1} parent=1 // pred_region
      _
    $region61: #{tpu_custom_call.1} parent=1 // pred_fallthru
      _
    %367 = vsyncpa [#allocation3], 1
    %368 = vsyncpa [#allocation6], 1
    %369 = vsyncpa [#allocation9], 1
    %370 = vsyncpa [#allocation4], 1

</llo_original>
